<compile_context>
chip_gen: v5e
topology: v5e:2x2
jax: 0.10.0
libtpu: 0.0.40
codegen_flags: <defaults>
</compile_context>

<pallas_src>
import functools

import jax
import jax.numpy as jnp
from jax.experimental import pallas as pl
from jax.experimental.pallas import tpu as pltpu


LANE = 128   # TPU lane width: K and Cout are padded up to multiples of this


def _round_up(x, m):
    return ((x + m - 1) // m) * m


def _pick_tile(total, cap):
    """Largest multiple-of-128 tile <= cap that evenly divides `total`.

    `total` is always a multiple of 128 here, so this terminates at >= 128.
    """
    cap = min(cap, total)
    for t in range(cap, 0, -LANE):
        if total % t == 0:
            return t
    return LANE


# ----------------------------------------------------------------------------
# Pallas kernel: tiled (im2col-matmul) + folded-BN affine + PReLU epilogue
# ----------------------------------------------------------------------------
def _conv_bn_prelu_kernel(p_ref, w_ref, par_ref, o_ref, acc_ref):
    # p_ref:   (TM, TK)   bf16 im2col patch rows (K zero-padded)
    # w_ref:   (TK, TN)   bf16 conv weights (K, Cout zero-padded)
    # par_ref: (3, TN)    f32 [scale; shift; alpha] per output channel
    # o_ref:   (TM, TN)   f32 output tile (lane-dense: TN is a multiple of 128)
    # acc_ref: (TM, TN)   f32 accumulator scratch (resident across the K axis)
    k_id = pl.program_id(2)

    @pl.when(k_id == 0)
    def _init():
        acc_ref[...] = jnp.zeros_like(acc_ref)

    acc_ref[...] += jnp.dot(p_ref[...], w_ref[...],
                            preferred_element_type=jnp.float32)

    @pl.when(k_id == pl.num_programs(2) - 1)
    def _epilogue():
        scale = par_ref[0:1, :]
        shift = par_ref[1:2, :]
        alpha = par_ref[2:3, :]
        y = acc_ref[...] * scale + shift          # folded inference BatchNorm
        o_ref[...] = jnp.where(y > 0.0, y, alpha * y).astype(o_ref.dtype)


# ----------------------------------------------------------------------------
# Host-side glue
# ----------------------------------------------------------------------------
def _im2col_nhwc(x_nhwc, kh, kw, stride, padding, k_pad):
    """NHWC -> (N, OH, OW, Kp) patches, K axis zero-padded to k_pad.

    Built as one concatenate of shifted strided views plus a zero block so XLA
    fuses pad + slices + concat into a single padded-buffer write.
    """
    n, h, w, c = x_nhwc.shape
    xp = jnp.pad(x_nhwc, ((0, 0), (padding, padding), (padding, padding), (0, 0)))
    oh = (h + 2 * padding - kh) // stride + 1
    ow = (w + 2 * padding - kw) // stride + 1
    cols = []
    for i in range(kh):
        for j in range(kw):
            cols.append(
                xp[:, i: i + stride * oh: stride, j: j + stride * ow: stride, :])
    k = kh * kw * c
    if k_pad > k:
        cols.append(jnp.zeros((n, oh, ow, k_pad - k), dtype=x_nhwc.dtype))
    patches = jnp.concatenate(cols, axis=-1)   # (N, OH, OW, Kp), order (kh,kw,cin)
    return patches, oh, ow


@functools.partial(jax.jit, static_argnames=("stride", "padding"))
def convolution_forward(x_nchw, conv_w, bn_gamma, bn_beta, bn_mean, bn_var,
                        prelu_alpha, *, stride, padding, eps=1e-5):
    """x_nchw: (N, Cin, H, W); conv_w: (Cout, Cin, KH, KW) (PyTorch layout)."""
    cout, cin, kh, kw = conv_w.shape
    n = x_nchw.shape[0]
    k = kh * kw * cin
    kp = _round_up(k, LANE)
    coutp = _round_up(cout, LANE)

    # NCHW -> NHWC (module interface is NCHW; an end-to-end NHWC pipeline could
    # drop this and the final transpose).  bf16 halves patch-stream HBM traffic.
    x_nhwc = jnp.transpose(x_nchw, (0, 2, 3, 1)).astype(jnp.bfloat16)
    patches, oh, ow = _im2col_nhwc(x_nhwc, kh, kw, stride, padding, kp)

    m = n * oh * ow
    tm = 512
    if m < tm:                       # tiny problems: one full-M tile, no waste
        tm = max(8, _round_up(m, 8))
    m_pad = _round_up(m, tm)
    tk = _pick_tile(kp, 1024)        # keep weight / patch tiles VMEM-bounded
    tn = _pick_tile(coutp, 512)

    patches = patches.reshape(m, kp)
    if m_pad != m:
        patches = jnp.pad(patches, ((0, m_pad - m), (0, 0)))

    # weights: (Cout, Cin, KH, KW) -> (KH, KW, Cin, Cout) -> (K, Cout) -> pad
    w2d = jnp.transpose(conv_w, (2, 3, 1, 0)).reshape(k, cout)
    w2d = jnp.pad(w2d, ((0, kp - k), (0, coutp - cout))).astype(jnp.bfloat16)

    # fold inference-mode BatchNorm into per-channel scale/shift (kept in f32);
    # stack [scale; shift; alpha] into one small resident operand.
    scale = (bn_gamma / jnp.sqrt(bn_var + eps)).astype(jnp.float32)
    shift = bn_beta.astype(jnp.float32) - bn_mean.astype(jnp.float32) * scale
    alpha = prelu_alpha.astype(jnp.float32)
    pad_c = (0, coutp - cout)        # padded channels are dead: W cols are zero
    params = jnp.stack([
        jnp.pad(scale, pad_c, constant_values=1.0),
        jnp.pad(shift, pad_c),
        jnp.pad(alpha, pad_c),
    ], axis=0)                                    # (3, Coutp) f32

    grid = (m_pad // tm, coutp // tn, kp // tk)
    out = pl.pallas_call(
        _conv_bn_prelu_kernel,
        out_shape=jax.ShapeDtypeStruct((m_pad, coutp), jnp.float32),
        grid_spec=pltpu.PrefetchScalarGridSpec(
            num_scalar_prefetch=0,
            grid=grid,
            in_specs=[
                pl.BlockSpec((tm, tk), lambda i, j, l: (i, l)),   # patch rows
                pl.BlockSpec((tk, tn), lambda i, j, l: (l, j)),   # weights
                pl.BlockSpec((3, tn), lambda i, j, l: (0, j)),    # BN/PReLU params
            ],
            out_specs=pl.BlockSpec((tm, tn), lambda i, j, l: (i, j)),
            scratch_shapes=[pltpu.VMEM((tm, tn), jnp.float32)],
        ),
        compiler_params=pltpu.CompilerParams(
            dimension_semantics=("parallel", "parallel", "arbitrary"),
            vmem_limit_bytes=32 * 1024 * 1024,    # safe on v5e/v6e/v7x
        ),
    )(patches, w2d, params)

    out = out[:m, :cout].reshape(n, oh, ow, cout)    # NHWC, real rows/channels
    return jnp.transpose(out, (0, 3, 1, 2))          # back to NCHW (module API)


# ----------------------------------------------------------------------------
# Pure-JAX reference (same bf16 input rounding, f32 accumulation)
# ----------------------------------------------------------------------------
def _reference(x_nchw, conv_w, bn_gamma, bn_beta, bn_mean, bn_var, prelu_alpha,
               stride, padding, eps=1e-5):
    xb = x_nchw.astype(jnp.bfloat16).astype(jnp.float32)
    wb = conv_w.astype(jnp.bfloat16).astype(jnp.float32)
    y = jax.lax.conv_general_dilated(
        xb, wb,
        window_strides=(stride, stride),
        padding=((padding, padding), (padding, padding)),
        dimension_numbers=("NCHW", "OIHW", "NCHW"),
    )
    scale = bn_gamma / jnp.sqrt(bn_var + eps)
    shift = bn_beta - bn_mean * scale
    y = y * scale[None, :, None, None] + shift[None, :, None, None]
    a = prelu_alpha[None, :, None, None]
    return jnp.where(y > 0.0, y, a * y)


if __name__ == "__main__":
    # Module config (small, consistent with the nn.Module)
    in_channels, out_channels = 4, 8
    kernel_size, stride, padding = 3, 1, 1
    N, H, W = 2, 16, 16

    key = jax.random.PRNGKey(0)
    k_x, k_w, k_g, k_b, k_m, k_v, _ = jax.random.split(key, 7)

    x = jax.random.normal(k_x, (N, in_channels, H, W), dtype=jnp.float32)

    # Deterministic synthetic parameters (shapes match the module __init__)
    conv_w = 0.1 * jax.random.normal(
        k_w, (out_channels, in_channels, kernel_size, kernel_size), dtype=jnp.float32)
    bn_gamma = 1.0 + 0.1 * jax.random.normal(k_g, (out_channels,), dtype=jnp.float32)
    bn_beta = 0.1 * jax.random.normal(k_b, (out_channels,), dtype=jnp.float32)
    bn_mean = 0.1 * jax.random.normal(k_m, (out_channels,), dtype=jnp.float32)
    bn_var = jnp.abs(1.0 + 0.1 * jax.random.normal(k_v, (out_channels,), dtype=jnp.float32))
    prelu_alpha = jnp.full((out_channels,), 0.25, dtype=jnp.float32)  # PyTorch default
    # Note: the module's unused `self.weight` parameter does not affect forward().

    out = convolution_forward(
        x, conv_w, bn_gamma, bn_beta, bn_mean, bn_var, prelu_alpha,
        stride=stride, padding=padding)
    out = jax.block_until_ready(out)

    ref = _reference(x, conv_w, bn_gamma, bn_beta, bn_mean, bn_var, prelu_alpha,
                     stride, padding)
    assert out.shape == (N, out_channels, H, W)
    err = float(jnp.max(jnp.abs(out - ref)))
    assert err < 2e-3, f"max abs error {err}"

    print("KERNEL_OK")
</pallas_src>

<mosaic_0001>
module attributes {stable_mosaic.version = 11 : i64} {
  func.func @_conv_bn_prelu_kernel(%arg0: i32, %arg1: i32, %arg2: i32, %arg3: memref<512x128xbf16, #tpu.memory_space<vmem>>, %arg4: memref<128x128xbf16, #tpu.memory_space<vmem>>, %arg5: memref<3x128xf32, #tpu.memory_space<vmem>>, %arg6: memref<512x128xf32, #tpu.memory_space<vmem>>, %arg7: memref<512x128xf32, #tpu.memory_space<vmem>>) attributes {dimension_semantics = [#tpu.dimension_semantics<parallel>, #tpu.dimension_semantics<parallel>, #tpu.dimension_semantics<arbitrary>], iteration_bounds = array<i64: 1, 1, 1>, scalar_prefetch = 0 : i64, scratch_operands = 1 : i64, tpu.core_type = #tpu.core_type<tc>, window_params = [{transform_indices = @transform_0, window_bounds = array<i64: 512, 128>}, {transform_indices = @transform_1, window_bounds = array<i64: 128, 128>}, {transform_indices = @transform_2, window_bounds = array<i64: 3, 128>}, {transform_indices = @transform_3, window_bounds = array<i64: 512, 128>}]} {
    %c0_i32 = arith.constant 0 : i32
    %0 = arith.cmpi eq, %arg2, %c0_i32 : i32
    %1 = arith.extui %0 : i1 to i32
    %c0_i32_0 = arith.constant 0 : i32
    %2 = arith.cmpi ne, %1, %c0_i32_0 : i32
    scf.if %2 {
      %cst_10 = arith.constant 0.000000e+00 : f32
      %12 = vector.broadcast %cst_10 : f32 to vector<512x128xf32>
      %c0_11 = arith.constant 0 : index
      %c0_12 = arith.constant 0 : index
      %13 = vector.load %arg7[%c0_11, %c0_12] : memref<512x128xf32, #tpu.memory_space<vmem>>, vector<512x128xf32>
      tpu.vector_store %arg7[%c0_11, %c0_12], %12 {strides = array<i32>} : memref<512x128xf32, #tpu.memory_space<vmem>>, vector<512x128xf32>,
    } else {
    }
    %c0 = arith.constant 0 : index
    %c0_1 = arith.constant 0 : index
    %3 = vector.load %arg7[%c0, %c0_1] : memref<512x128xf32, #tpu.memory_space<vmem>>, vector<512x128xf32>
    %c0_2 = arith.constant 0 : index
    %c0_3 = arith.constant 0 : index
    %4 = vector.load %arg3[%c0_2, %c0_3] : memref<512x128xbf16, #tpu.memory_space<vmem>>, vector<512x128xbf16>
    %c0_4 = arith.constant 0 : index
    %c0_5 = arith.constant 0 : index
    %5 = vector.load %arg4[%c0_4, %c0_5] : memref<128x128xbf16, #tpu.memory_space<vmem>>, vector<128x128xbf16>
    %cst = arith.constant dense<0.000000e+00> : vector<512x128xf32>
    %6 = tpu.matmul %4, %5, %cst {dimension_numbers = #tpu.dot_dimension_numbers<[1], [0], [0], [1], [0, 0, 1, 1], [], []>} : vector<512x128xbf16>, vector<128x128xbf16>, vector<512x128xf32> -> vector<512x128xf32>
    %7 = arith.addf %3, %6 : vector<512x128xf32>
    %c0_6 = arith.constant 0 : index
    %c0_7 = arith.constant 0 : index
    %8 = vector.load %arg7[%c0_6, %c0_7] : memref<512x128xf32, #tpu.memory_space<vmem>>, vector<512x128xf32>
    tpu.vector_store %arg7[%c0_6, %c0_7], %7 {strides = array<i32>} : memref<512x128xf32, #tpu.memory_space<vmem>>, vector<512x128xf32>,
    %c0_i32_8 = arith.constant 0 : i32
    %9 = arith.cmpi eq, %arg2, %c0_i32_8 : i32
    %10 = arith.extui %9 : i1 to i32
    %c0_i32_9 = arith.constant 0 : i32
    %11 = arith.cmpi ne, %10, %c0_i32_9 : i32
    scf.if %11 {
      %c0_10 = arith.constant 0 : index
      %c0_11 = arith.constant 0 : index
      %12 = vector.load %arg5[%c0_10, %c0_11] : memref<3x128xf32, #tpu.memory_space<vmem>>, vector<1x128xf32>
      %c1 = arith.constant 1 : index
      %c0_12 = arith.constant 0 : index
      %13 = vector.load %arg5[%c1, %c0_12] : memref<3x128xf32, #tpu.memory_space<vmem>>, vector<1x128xf32>
      %c2 = arith.constant 2 : index
      %c0_13 = arith.constant 0 : index
      %14 = vector.load %arg5[%c2, %c0_13] : memref<3x128xf32, #tpu.memory_space<vmem>>, vector<1x128xf32>
      %c0_14 = arith.constant 0 : index
      %c0_15 = arith.constant 0 : index
      %15 = vector.load %arg7[%c0_14, %c0_15] : memref<512x128xf32, #tpu.memory_space<vmem>>, vector<512x128xf32>
      %16 = vector.broadcast %12 : vector<1x128xf32> to vector<512x128xf32>
      %17 = arith.mulf %15, %16 : vector<512x128xf32>
      %18 = vector.broadcast %13 : vector<1x128xf32> to vector<512x128xf32>
      %19 = arith.addf %17, %18 : vector<512x128xf32>
      %cst_16 = arith.constant 0.000000e+00 : f32
      %20 = vector.broadcast %cst_16 : f32 to vector<512x128xf32>
      %21 = arith.cmpf ogt, %19, %20 : vector<512x128xf32>
      %22 = vector.broadcast %14 : vector<1x128xf32> to vector<512x128xf32>
      %23 = arith.mulf %22, %19 : vector<512x128xf32>
      %24 = arith.select %21, %19, %23 : vector<512x128xi1>, vector<512x128xf32>
      %c0_17 = arith.constant 0 : index
      %c0_18 = arith.constant 0 : index
      %25 = vector.load %arg6[%c0_17, %c0_18] : memref<512x128xf32, #tpu.memory_space<vmem>>, vector<512x128xf32>
      tpu.vector_store %arg6[%c0_17, %c0_18], %24 {strides = array<i32>} : memref<512x128xf32, #tpu.memory_space<vmem>>, vector<512x128xf32>,
    } else {
    }
    return
  }
  func.func @transform_0(%arg0: i32, %arg1: i32, %arg2: i32) -> (i32, i32) {
    %c0_i32 = arith.constant 0 : i32
    return %arg0, %arg2 : i32, i32
  }
  func.func @transform_1(%arg0: i32, %arg1: i32, %arg2: i32) -> (i32, i32) {
    %c0_i32 = arith.constant 0 : i32
    return %arg2, %arg1 : i32, i32
  }
  func.func @transform_2(%arg0: i32, %arg1: i32, %arg2: i32) -> (i32, i32) {
    %c0_i32 = arith.constant 0 : i32
    %c0_i32_0 = arith.constant 0 : i32
    return %c0_i32, %arg1 : i32, i32
  }
  func.func @transform_3(%arg0: i32, %arg1: i32, %arg2: i32) -> (i32, i32) {
    %c0_i32 = arith.constant 0 : i32
    return %arg0, %arg1 : i32, i32
  }
}

</mosaic_0001>

<llo_original>
// kernel: convolution_forward.1
$region0: #{convolution_forward.1}
  #allocation0 [shape = 'u32[]', space=smem, size = 0x4, offset = 0x4, fixed_abs, tag = 'smem constant byte address 0x4 - core index']
  #allocation1 [shape = 'u32[72,128]{1,0:T(1,128)}', space=vmem, size = 0x9000, scoped, tag = 'internal scratch']
  #allocation2 [shape = 'f32[512,128]{1,0:T(8,128)}', space=vmem, size = 0x40000, scoped, tag = 'scratch operand']
  %s0 = inlined_call_operand.vmem [shape: bf16[512,128], index: 0, kind: input, shape index: {}]
  %s1 = inlined_call_operand.vmem [shape: bf16[128,128], index: 1, kind: input, shape index: {}]
  %s2 = inlined_call_operand.vmem [shape: f32[3,128], index: 2, kind: input, shape index: {}]
  %s3 = inlined_call_operand.vmem [shape: f32[512,128], index: 3, kind: output, shape index: {}]
  %s4 = sld [smem:[#allocation0]]
  $region30: #{convolution_forward.1} parent=0
    _
  %s6 = ssub.s32 1, %s4
  %s7 = scalar_select 0, %s6, %s4
  // Predicated region
  $region2: #{convolution_forward.1} parent=0 // pred_check
    _
  $region3: #{convolution_forward.1} parent=0 // pred_check_branch
    %9 = sbr.rel (0) target = $region5
  $region4: #{convolution_forward.1} parent=0 // pred_region
    _
  $region5: #{convolution_forward.1} parent=0 // pred_fallthru
    _
  // Predicated region
  $region6: #{convolution_forward.1} parent=0 // pred_check
    _
  $region7: #{convolution_forward.1} parent=0 // pred_check_branch
    %11 = sbr.rel (0) target = $region9
  $region8: #{convolution_forward.1} parent=0 // pred_region
    _
  $region9: #{convolution_forward.1} parent=0 // pred_fallthru
    _
  // Predicated region
  $region10: #{convolution_forward.1} parent=0 // pred_check
    _
  $region11: #{convolution_forward.1} parent=0 // pred_check_branch
    %13 = sbr.rel (0) target = $region13
  $region12: #{convolution_forward.1} parent=0 // pred_region
    _
  $region13: #{convolution_forward.1} parent=0 // pred_fallthru
    _
  %p14 = scmp.eq.s32.totalorder 0, 0
  // Predicated region
  $region14: #{convolution_forward.1} parent=0 // pred_check
    %p15 = pneg %p14
  $region15: #{convolution_forward.1} parent=0 // pred_check_branch
    %17 = sbr.rel (%p15) target = $region17
  $region16: #{convolution_forward.1} parent=0 // pred_region
    %18 = vst [vmem:[#allocation2] sm:$0xff] 0.0
    %19 = vst [vmem:[#allocation2 + $0x8] sm:$0xff] 0.0
    %20 = vst [vmem:[#allocation2 + $0x10] sm:$0xff] 0.0
    %21 = vst [vmem:[#allocation2 + $0x18] sm:$0xff] 0.0
    %22 = vst [vmem:[#allocation2 + $0x20] sm:$0xff] 0.0
    %23 = vst [vmem:[#allocation2 + $0x28] sm:$0xff] 0.0
    %24 = vst [vmem:[#allocation2 + $0x30] sm:$0xff] 0.0
    %25 = vst [vmem:[#allocation2 + $0x38] sm:$0xff] 0.0
    %26 = vst [vmem:[#allocation2 + $0x40] sm:$0xff] 0.0
    %27 = vst [vmem:[#allocation2 + $0x48] sm:$0xff] 0.0
    %28 = vst [vmem:[#allocation2 + $0x50] sm:$0xff] 0.0
    %29 = vst [vmem:[#allocation2 + $0x58] sm:$0xff] 0.0
    %30 = vst [vmem:[#allocation2 + $0x60] sm:$0xff] 0.0
    %31 = vst [vmem:[#allocation2 + $0x68] sm:$0xff] 0.0
    %32 = vst [vmem:[#allocation2 + $0x70] sm:$0xff] 0.0
    %33 = vst [vmem:[#allocation2 + $0x78] sm:$0xff] 0.0
    %34 = vst [vmem:[#allocation2 + $0x80] sm:$0xff] 0.0
    %35 = vst [vmem:[#allocation2 + $0x88] sm:$0xff] 0.0
    %36 = vst [vmem:[#allocation2 + $0x90] sm:$0xff] 0.0
    %37 = vst [vmem:[#allocation2 + $0x98] sm:$0xff] 0.0
    %38 = vst [vmem:[#allocation2 + $0xa0] sm:$0xff] 0.0
    %39 = vst [vmem:[#allocation2 + $0xa8] sm:$0xff] 0.0
    %40 = vst [vmem:[#allocation2 + $0xb0] sm:$0xff] 0.0
    %41 = vst [vmem:[#allocation2 + $0xb8] sm:$0xff] 0.0
    %42 = vst [vmem:[#allocation2 + $0xc0] sm:$0xff] 0.0
    %43 = vst [vmem:[#allocation2 + $0xc8] sm:$0xff] 0.0
    %44 = vst [vmem:[#allocation2 + $0xd0] sm:$0xff] 0.0
    %45 = vst [vmem:[#allocation2 + $0xd8] sm:$0xff] 0.0
    %46 = vst [vmem:[#allocation2 + $0xe0] sm:$0xff] 0.0
    %47 = vst [vmem:[#allocation2 + $0xe8] sm:$0xff] 0.0
    %48 = vst [vmem:[#allocation2 + $0xf0] sm:$0xff] 0.0
    %49 = vst [vmem:[#allocation2 + $0xf8] sm:$0xff] 0.0
    %50 = vst [vmem:[#allocation2 + $0x100] sm:$0xff] 0.0
    %51 = vst [vmem:[#allocation2 + $0x108] sm:$0xff] 0.0
    %52 = vst [vmem:[#allocation2 + $0x110] sm:$0xff] 0.0
    %53 = vst [vmem:[#allocation2 + $0x118] sm:$0xff] 0.0
    %54 = vst [vmem:[#allocation2 + $0x120] sm:$0xff] 0.0
    %55 = vst [vmem:[#allocation2 + $0x128] sm:$0xff] 0.0
    %56 = vst [vmem:[#allocation2 + $0x130] sm:$0xff] 0.0
    %57 = vst [vmem:[#allocation2 + $0x138] sm:$0xff] 0.0
    %58 = vst [vmem:[#allocation2 + $0x140] sm:$0xff] 0.0
    %59 = vst [vmem:[#allocation2 + $0x148] sm:$0xff] 0.0
    %60 = vst [vmem:[#allocation2 + $0x150] sm:$0xff] 0.0
    %61 = vst [vmem:[#allocation2 + $0x158] sm:$0xff] 0.0
    %62 = vst [vmem:[#allocation2 + $0x160] sm:$0xff] 0.0
    %63 = vst [vmem:[#allocation2 + $0x168] sm:$0xff] 0.0
    %64 = vst [vmem:[#allocation2 + $0x170] sm:$0xff] 0.0
    %65 = vst [vmem:[#allocation2 + $0x178] sm:$0xff] 0.0
    %66 = vst [vmem:[#allocation2 + $0x180] sm:$0xff] 0.0
    %67 = vst [vmem:[#allocation2 + $0x188] sm:$0xff] 0.0
    %68 = vst [vmem:[#allocation2 + $0x190] sm:$0xff] 0.0
    %69 = vst [vmem:[#allocation2 + $0x198] sm:$0xff] 0.0
    %70 = vst [vmem:[#allocation2 + $0x1a0] sm:$0xff] 0.0
    %71 = vst [vmem:[#allocation2 + $0x1a8] sm:$0xff] 0.0
    %72 = vst [vmem:[#allocation2 + $0x1b0] sm:$0xff] 0.0
    %73 = vst [vmem:[#allocation2 + $0x1b8] sm:$0xff] 0.0
    %74 = vst [vmem:[#allocation2 + $0x1c0] sm:$0xff] 0.0
    %75 = vst [vmem:[#allocation2 + $0x1c8] sm:$0xff] 0.0
    %76 = vst [vmem:[#allocation2 + $0x1d0] sm:$0xff] 0.0
    %77 = vst [vmem:[#allocation2 + $0x1d8] sm:$0xff] 0.0
    %78 = vst [vmem:[#allocation2 + $0x1e0] sm:$0xff] 0.0
    %79 = vst [vmem:[#allocation2 + $0x1e8] sm:$0xff] 0.0
    %80 = vst [vmem:[#allocation2 + $0x1f0] sm:$0xff] 0.0
    %81 = vst [vmem:[#allocation2 + $0x1f8] sm:$0xff] 0.0
  $region17: #{convolution_forward.1} parent=0 // pred_fallthru
    _
  %v82 = vld [vmem:[#allocation2] sm:$0xff]
  %v83 = vld [vmem:[#allocation2 + $0x8] sm:$0xff]
  %v84 = vld [vmem:[#allocation2 + $0x10] sm:$0xff]
  %v85 = vld [vmem:[#allocation2 + $0x18] sm:$0xff]
  %v86 = vld [vmem:[#allocation2 + $0x20] sm:$0xff]
  %v87 = vld [vmem:[#allocation2 + $0x28] sm:$0xff]
  %v88 = vld [vmem:[#allocation2 + $0x30] sm:$0xff]
  %v89 = vld [vmem:[#allocation2 + $0x38] sm:$0xff]
  %v90 = vld [vmem:[#allocation2 + $0x40] sm:$0xff]
  %v91 = vld [vmem:[#allocation2 + $0x48] sm:$0xff]
  %v92 = vld [vmem:[#allocation2 + $0x50] sm:$0xff]
  %v93 = vld [vmem:[#allocation2 + $0x58] sm:$0xff]
  %v94 = vld [vmem:[#allocation2 + $0x60] sm:$0xff]
  %v95 = vld [vmem:[#allocation2 + $0x68] sm:$0xff]
  %v96 = vld [vmem:[#allocation2 + $0x70] sm:$0xff]
  %v97 = vld [vmem:[#allocation2 + $0x78] sm:$0xff]
  %v98 = vld [vmem:[#allocation2 + $0x80] sm:$0xff]
  %v99 = vld [vmem:[#allocation2 + $0x88] sm:$0xff]
  %v100 = vld [vmem:[#allocation2 + $0x90] sm:$0xff]
  %v101 = vld [vmem:[#allocation2 + $0x98] sm:$0xff]
  %v102 = vld [vmem:[#allocation2 + $0xa0] sm:$0xff]
  %v103 = vld [vmem:[#allocation2 + $0xa8] sm:$0xff]
  %v104 = vld [vmem:[#allocation2 + $0xb0] sm:$0xff]
  %v105 = vld [vmem:[#allocation2 + $0xb8] sm:$0xff]
  %v106 = vld [vmem:[#allocation2 + $0xc0] sm:$0xff]
  %v107 = vld [vmem:[#allocation2 + $0xc8] sm:$0xff]
  %v108 = vld [vmem:[#allocation2 + $0xd0] sm:$0xff]
  %v109 = vld [vmem:[#allocation2 + $0xd8] sm:$0xff]
  %v110 = vld [vmem:[#allocation2 + $0xe0] sm:$0xff]
  %v111 = vld [vmem:[#allocation2 + $0xe8] sm:$0xff]
  %v112 = vld [vmem:[#allocation2 + $0xf0] sm:$0xff]
  %v113 = vld [vmem:[#allocation2 + $0xf8] sm:$0xff]
  %v114 = vld [vmem:[#allocation2 + $0x100] sm:$0xff]
  %v115 = vld [vmem:[#allocation2 + $0x108] sm:$0xff]
  %v116 = vld [vmem:[#allocation2 + $0x110] sm:$0xff]
  %v117 = vld [vmem:[#allocation2 + $0x118] sm:$0xff]
  %v118 = vld [vmem:[#allocation2 + $0x120] sm:$0xff]
  %v119 = vld [vmem:[#allocation2 + $0x128] sm:$0xff]
  %v120 = vld [vmem:[#allocation2 + $0x130] sm:$0xff]
  %v121 = vld [vmem:[#allocation2 + $0x138] sm:$0xff]
  %v122 = vld [vmem:[#allocation2 + $0x140] sm:$0xff]
  %v123 = vld [vmem:[#allocation2 + $0x148] sm:$0xff]
  %v124 = vld [vmem:[#allocation2 + $0x150] sm:$0xff]
  %v125 = vld [vmem:[#allocation2 + $0x158] sm:$0xff]
  %v126 = vld [vmem:[#allocation2 + $0x160] sm:$0xff]
  %v127 = vld [vmem:[#allocation2 + $0x168] sm:$0xff]
  %v128 = vld [vmem:[#allocation2 + $0x170] sm:$0xff]
  %v129 = vld [vmem:[#allocation2 + $0x178] sm:$0xff]
  %v130 = vld [vmem:[#allocation2 + $0x180] sm:$0xff]
  %v131 = vld [vmem:[#allocation2 + $0x188] sm:$0xff]
  %v132 = vld [vmem:[#allocation2 + $0x190] sm:$0xff]
  %v133 = vld [vmem:[#allocation2 + $0x198] sm:$0xff]
  %v134 = vld [vmem:[#allocation2 + $0x1a0] sm:$0xff]
  %v135 = vld [vmem:[#allocation2 + $0x1a8] sm:$0xff]
  %v136 = vld [vmem:[#allocation2 + $0x1b0] sm:$0xff]
  %v137 = vld [vmem:[#allocation2 + $0x1b8] sm:$0xff]
  %v138 = vld [vmem:[#allocation2 + $0x1c0] sm:$0xff]
  %v139 = vld [vmem:[#allocation2 + $0x1c8] sm:$0xff]
  %v140 = vld [vmem:[#allocation2 + $0x1d0] sm:$0xff]
  %v141 = vld [vmem:[#allocation2 + $0x1d8] sm:$0xff]
  %v142 = vld [vmem:[#allocation2 + $0x1e0] sm:$0xff]
  %v143 = vld [vmem:[#allocation2 + $0x1e8] sm:$0xff]
  %v144 = vld [vmem:[#allocation2 + $0x1f0] sm:$0xff]
  %v145 = vld [vmem:[#allocation2 + $0x1f8] sm:$0xff]
  %v146 = vld [vmem:[%s0] sm:$0xf]
  %v147 = vld [vmem:[%s0 + $0x4] sm:$0xf]
  %v148 = vld [vmem:[%s0 + $0x8] sm:$0xf]
  %v149 = vld [vmem:[%s0 + $0xc] sm:$0xf]
  %v150 = vld [vmem:[%s0 + $0x10] sm:$0xf]
  %v151 = vld [vmem:[%s0 + $0x14] sm:$0xf]
  %v152 = vld [vmem:[%s0 + $0x18] sm:$0xf]
  %v153 = vld [vmem:[%s0 + $0x1c] sm:$0xf]
  %v154 = vld [vmem:[%s0 + $0x20] sm:$0xf]
  %v155 = vld [vmem:[%s0 + $0x24] sm:$0xf]
  %v156 = vld [vmem:[%s0 + $0x28] sm:$0xf]
  %v157 = vld [vmem:[%s0 + $0x2c] sm:$0xf]
  %v158 = vld [vmem:[%s0 + $0x30] sm:$0xf]
  %v159 = vld [vmem:[%s0 + $0x34] sm:$0xf]
  %v160 = vld [vmem:[%s0 + $0x38] sm:$0xf]
  %v161 = vld [vmem:[%s0 + $0x3c] sm:$0xf]
  %v162 = vld [vmem:[%s0 + $0x40] sm:$0xf]
  %v163 = vld [vmem:[%s0 + $0x44] sm:$0xf]
  %v164 = vld [vmem:[%s0 + $0x48] sm:$0xf]
  %v165 = vld [vmem:[%s0 + $0x4c] sm:$0xf]
  %v166 = vld [vmem:[%s0 + $0x50] sm:$0xf]
  %v167 = vld [vmem:[%s0 + $0x54] sm:$0xf]
  %v168 = vld [vmem:[%s0 + $0x58] sm:$0xf]
  %v169 = vld [vmem:[%s0 + $0x5c] sm:$0xf]
  %v170 = vld [vmem:[%s0 + $0x60] sm:$0xf]
  %v171 = vld [vmem:[%s0 + $0x64] sm:$0xf]
  %v172 = vld [vmem:[%s0 + $0x68] sm:$0xf]
  %v173 = vld [vmem:[%s0 + $0x6c] sm:$0xf]
  %v174 = vld [vmem:[%s0 + $0x70] sm:$0xf]
  %v175 = vld [vmem:[%s0 + $0x74] sm:$0xf]
  %v176 = vld [vmem:[%s0 + $0x78] sm:$0xf]
  %v177 = vld [vmem:[%s0 + $0x7c] sm:$0xf]
  %v178 = vld [vmem:[%s0 + $0x80] sm:$0xf]
  %v179 = vld [vmem:[%s0 + $0x84] sm:$0xf]
  %v180 = vld [vmem:[%s0 + $0x88] sm:$0xf]
  %v181 = vld [vmem:[%s0 + $0x8c] sm:$0xf]
  %v182 = vld [vmem:[%s0 + $0x90] sm:$0xf]
  %v183 = vld [vmem:[%s0 + $0x94] sm:$0xf]
  %v184 = vld [vmem:[%s0 + $0x98] sm:$0xf]
  %v185 = vld [vmem:[%s0 + $0x9c] sm:$0xf]
  %v186 = vld [vmem:[%s0 + $0xa0] sm:$0xf]
  %v187 = vld [vmem:[%s0 + $0xa4] sm:$0xf]
  %v188 = vld [vmem:[%s0 + $0xa8] sm:$0xf]
  %v189 = vld [vmem:[%s0 + $0xac] sm:$0xf]
  %v190 = vld [vmem:[%s0 + $0xb0] sm:$0xf]
  %v191 = vld [vmem:[%s0 + $0xb4] sm:$0xf]
  %v192 = vld [vmem:[%s0 + $0xb8] sm:$0xf]
  %v193 = vld [vmem:[%s0 + $0xbc] sm:$0xf]
  %v194 = vld [vmem:[%s0 + $0xc0] sm:$0xf]
  %v195 = vld [vmem:[%s0 + $0xc4] sm:$0xf]
  %v196 = vld [vmem:[%s0 + $0xc8] sm:$0xf]
  %v197 = vld [vmem:[%s0 + $0xcc] sm:$0xf]
  %v198 = vld [vmem:[%s0 + $0xd0] sm:$0xf]
  %v199 = vld [vmem:[%s0 + $0xd4] sm:$0xf]
  %v200 = vld [vmem:[%s0 + $0xd8] sm:$0xf]
  %v201 = vld [vmem:[%s0 + $0xdc] sm:$0xf]
  %v202 = vld [vmem:[%s0 + $0xe0] sm:$0xf]
  %v203 = vld [vmem:[%s0 + $0xe4] sm:$0xf]
  %v204 = vld [vmem:[%s0 + $0xe8] sm:$0xf]
  %v205 = vld [vmem:[%s0 + $0xec] sm:$0xf]
  %v206 = vld [vmem:[%s0 + $0xf0] sm:$0xf]
  %v207 = vld [vmem:[%s0 + $0xf4] sm:$0xf]
  %v208 = vld [vmem:[%s0 + $0xf8] sm:$0xf]
  %v209 = vld [vmem:[%s0 + $0xfc] sm:$0xf]
  %v210 = vld [vmem:[%s1] sm:$0xf]
  %v211 = vld [vmem:[%s1 + $0x4] sm:$0xf]
  %v212 = vld [vmem:[%s1 + $0x8] sm:$0xf]
  %v213 = vld [vmem:[%s1 + $0xc] sm:$0xf]
  %v214 = vld [vmem:[%s1 + $0x10] sm:$0xf]
  %v215 = vld [vmem:[%s1 + $0x14] sm:$0xf]
  %v216 = vld [vmem:[%s1 + $0x18] sm:$0xf]
  %v217 = vld [vmem:[%s1 + $0x1c] sm:$0xf]
  %v218 = vld [vmem:[%s1 + $0x20] sm:$0xf]
  %v219 = vld [vmem:[%s1 + $0x24] sm:$0xf]
  %v220 = vld [vmem:[%s1 + $0x28] sm:$0xf]
  %v221 = vld [vmem:[%s1 + $0x2c] sm:$0xf]
  %v222 = vld [vmem:[%s1 + $0x30] sm:$0xf]
  %v223 = vld [vmem:[%s1 + $0x34] sm:$0xf]
  %v224 = vld [vmem:[%s1 + $0x38] sm:$0xf]
  %v225 = vld [vmem:[%s1 + $0x3c] sm:$0xf]
  %v290 = vunpack.c.l.b16 %v146
  %v291 = vunpack.c.l.b16 %v147
  %v292 = vunpack.c.l.b16 %v148
  %v293 = vunpack.c.l.b16 %v149
  %v294 = vunpack.c.l.b16 %v150
  %v295 = vunpack.c.l.b16 %v151
  %v296 = vunpack.c.l.b16 %v152
  %v297 = vunpack.c.l.b16 %v153
  %v298 = vunpack.c.l.b16 %v154
  %v299 = vunpack.c.l.b16 %v155
  %v300 = vunpack.c.l.b16 %v156
  %v301 = vunpack.c.l.b16 %v157
  %v302 = vunpack.c.l.b16 %v158
  %v303 = vunpack.c.l.b16 %v159
  %v304 = vunpack.c.l.b16 %v160
  %v305 = vunpack.c.l.b16 %v161
  %v306 = vunpack.c.l.b16 %v162
  %v307 = vunpack.c.l.b16 %v163
  %v308 = vunpack.c.l.b16 %v164
  %v309 = vunpack.c.l.b16 %v165
  %v310 = vunpack.c.l.b16 %v166
  %v311 = vunpack.c.l.b16 %v167
  %v312 = vunpack.c.l.b16 %v168
  %v313 = vunpack.c.l.b16 %v169
  %v314 = vunpack.c.l.b16 %v170
  %v315 = vunpack.c.l.b16 %v171
  %v316 = vunpack.c.l.b16 %v172
  %v317 = vunpack.c.l.b16 %v173
  %v318 = vunpack.c.l.b16 %v174
  %v319 = vunpack.c.l.b16 %v175
  %v320 = vunpack.c.l.b16 %v176
  %v321 = vunpack.c.l.b16 %v177
  %v322 = vunpack.c.l.b16 %v178
  %v323 = vunpack.c.l.b16 %v179
  %v324 = vunpack.c.l.b16 %v180
  %v325 = vunpack.c.l.b16 %v181
  %v326 = vunpack.c.l.b16 %v182
  %v327 = vunpack.c.l.b16 %v183
  %v328 = vunpack.c.l.b16 %v184
  %v329 = vunpack.c.l.b16 %v185
  %v330 = vunpack.c.l.b16 %v186
  %v331 = vunpack.c.l.b16 %v187
  %v332 = vunpack.c.l.b16 %v188
  %v333 = vunpack.c.l.b16 %v189
  %v334 = vunpack.c.l.b16 %v190
  %v335 = vunpack.c.l.b16 %v191
  %v336 = vunpack.c.l.b16 %v192
  %v337 = vunpack.c.l.b16 %v193
  %v338 = vunpack.c.l.b16 %v194
  %v339 = vunpack.c.l.b16 %v195
  %v340 = vunpack.c.l.b16 %v196
  %v341 = vunpack.c.l.b16 %v197
  %v342 = vunpack.c.l.b16 %v198
  %v343 = vunpack.c.l.b16 %v199
  %v344 = vunpack.c.l.b16 %v200
  %v345 = vunpack.c.l.b16 %v201
  %v346 = vunpack.c.l.b16 %v202
  %v347 = vunpack.c.l.b16 %v203
  %v348 = vunpack.c.l.b16 %v204
  %v349 = vunpack.c.l.b16 %v205
  %v350 = vunpack.c.l.b16 %v206
  %v351 = vunpack.c.l.b16 %v207
  %v352 = vunpack.c.l.b16 %v208
  %v353 = vunpack.c.l.b16 %v209
  %v354 = vpack.c.b16 %v291, %v290
  %v355 = vpack.c.b16 %v293, %v292
  %v356 = vpack.c.b16 %v295, %v294
  %v357 = vpack.c.b16 %v297, %v296
  %v358 = vpack.c.b16 %v299, %v298
  %v359 = vpack.c.b16 %v301, %v300
  %v360 = vpack.c.b16 %v303, %v302
  %v361 = vpack.c.b16 %v305, %v304
  %v362 = vpack.c.b16 %v307, %v306
  %v363 = vpack.c.b16 %v309, %v308
  %v364 = vpack.c.b16 %v311, %v310
  %v365 = vpack.c.b16 %v313, %v312
  %v366 = vpack.c.b16 %v315, %v314
  %v367 = vpack.c.b16 %v317, %v316
  %v368 = vpack.c.b16 %v319, %v318
  %v369 = vpack.c.b16 %v321, %v320
  %v370 = vpack.c.b16 %v323, %v322
  %v371 = vpack.c.b16 %v325, %v324
  %v372 = vpack.c.b16 %v327, %v326
  %v373 = vpack.c.b16 %v329, %v328
  %v374 = vpack.c.b16 %v331, %v330
  %v375 = vpack.c.b16 %v333, %v332
  %v376 = vpack.c.b16 %v335, %v334
  %v377 = vpack.c.b16 %v337, %v336
  %v378 = vpack.c.b16 %v339, %v338
  %v379 = vpack.c.b16 %v341, %v340
  %v380 = vpack.c.b16 %v343, %v342
  %v381 = vpack.c.b16 %v345, %v344
  %v382 = vpack.c.b16 %v347, %v346
  %v383 = vpack.c.b16 %v349, %v348
  %v384 = vpack.c.b16 %v351, %v350
  %v385 = vpack.c.b16 %v353, %v352
  %v434 = vunpack.c.l.b16 %v210
  %v435 = vunpack.c.l.b16 %v211
  %v436 = vunpack.c.l.b16 %v212
  %v437 = vunpack.c.l.b16 %v213
  %v438 = vunpack.c.l.b16 %v214
  %v439 = vunpack.c.l.b16 %v215
  %v440 = vunpack.c.l.b16 %v216
  %v441 = vunpack.c.l.b16 %v217
  %v442 = vunpack.c.l.b16 %v218
  %v443 = vunpack.c.l.b16 %v219
  %v444 = vunpack.c.l.b16 %v220
  %v445 = vunpack.c.l.b16 %v221
  %v446 = vunpack.c.l.b16 %v222
  %v447 = vunpack.c.l.b16 %v223
  %v448 = vunpack.c.l.b16 %v224
  %v449 = vunpack.c.l.b16 %v225
  %v450 = vpack.c.b16 %v435, %v434
  %v451 = vpack.c.b16 %v437, %v436
  %v452 = vpack.c.b16 %v439, %v438
  %v453 = vpack.c.b16 %v441, %v440
  %v454 = vpack.c.b16 %v443, %v442
  %v455 = vpack.c.b16 %v445, %v444
  %v456 = vpack.c.b16 %v447, %v446
  %v457 = vpack.c.b16 %v449, %v448
  %466 = vmatpush.bf16.msra.mxu0 %v457
  %467 = vmatpush.bf16.msra.mxu0 %v456
  %468 = vmatpush.bf16.msra.mxu0 %v455
  %469 = vmatpush.bf16.msra.mxu0 %v454
  %470 = vmatpush.bf16.msra.mxu0 %v453
  %471 = vmatpush.bf16.msra.mxu0 %v452
  %472 = vmatpush.bf16.msra.mxu0 %v451
  %473 = vmatpush.bf16.msra.mxu0 %v450
  %474 = vmatmul.bf16.gmra.mxu0 %v354
  %v475 = vpop.f32.mrf.mxu0
  %v476 = vadd.f32 0.0, %v475
  %v477 = vpop.f32.mrf.mxu0
  %v478 = vadd.f32 0.0, %v477
  %479 = vmatmul.bf16.gmra.mxu0 %v355
  %v480 = vpop.f32.mrf.mxu0
  %v481 = vadd.f32 0.0, %v480
  %v482 = vpop.f32.mrf.mxu0
  %v483 = vadd.f32 0.0, %v482
  %484 = vmatmul.bf16.gmra.mxu0 %v356
  %v485 = vpop.f32.mrf.mxu0
  %v486 = vadd.f32 0.0, %v485
  %v487 = vpop.f32.mrf.mxu0
  %v488 = vadd.f32 0.0, %v487
  %489 = vmatmul.bf16.gmra.mxu0 %v357
  %v490 = vpop.f32.mrf.mxu0
  %v491 = vadd.f32 0.0, %v490
  %v492 = vpop.f32.mrf.mxu0
  %v493 = vadd.f32 0.0, %v492
  %494 = vmatmul.bf16.gmra.mxu0 %v358
  %v495 = vpop.f32.mrf.mxu0
  %v496 = vadd.f32 0.0, %v495
  %v497 = vpop.f32.mrf.mxu0
  %v498 = vadd.f32 0.0, %v497
  %499 = vmatmul.bf16.gmra.mxu0 %v359
  %v500 = vpop.f32.mrf.mxu0
  %v501 = vadd.f32 0.0, %v500
  %v502 = vpop.f32.mrf.mxu0
  %v503 = vadd.f32 0.0, %v502
  %504 = vmatmul.bf16.gmra.mxu0 %v360
  %v505 = vpop.f32.mrf.mxu0
  %v506 = vadd.f32 0.0, %v505
  %v507 = vpop.f32.mrf.mxu0
  %v508 = vadd.f32 0.0, %v507
  %509 = vmatmul.bf16.gmra.mxu0 %v361
  %v510 = vpop.f32.mrf.mxu0
  %v511 = vadd.f32 0.0, %v510
  %v512 = vpop.f32.mrf.mxu0
  %v513 = vadd.f32 0.0, %v512
  %514 = vmatmul.bf16.gmra.mxu0 %v362
  %v515 = vpop.f32.mrf.mxu0
  %v516 = vadd.f32 0.0, %v515
  %v517 = vpop.f32.mrf.mxu0
  %v518 = vadd.f32 0.0, %v517
  %519 = vmatmul.bf16.gmra.mxu0 %v363
  %v520 = vpop.f32.mrf.mxu0
  %v521 = vadd.f32 0.0, %v520
  %v522 = vpop.f32.mrf.mxu0
  %v523 = vadd.f32 0.0, %v522
  %524 = vmatmul.bf16.gmra.mxu0 %v364
  %v525 = vpop.f32.mrf.mxu0
  %v526 = vadd.f32 0.0, %v525
  %v527 = vpop.f32.mrf.mxu0
  %v528 = vadd.f32 0.0, %v527
  %529 = vmatmul.bf16.gmra.mxu0 %v365
  %v530 = vpop.f32.mrf.mxu0
  %v531 = vadd.f32 0.0, %v530
  %v532 = vpop.f32.mrf.mxu0
  %v533 = vadd.f32 0.0, %v532
  %534 = vmatmul.bf16.gmra.mxu0 %v366
  %v535 = vpop.f32.mrf.mxu0
  %v536 = vadd.f32 0.0, %v535
  %v537 = vpop.f32.mrf.mxu0
  %v538 = vadd.f32 0.0, %v537
  %539 = vmatmul.bf16.gmra.mxu0 %v367
  %v540 = vpop.f32.mrf.mxu0
  %v541 = vadd.f32 0.0, %v540
  %v542 = vpop.f32.mrf.mxu0
  %v543 = vadd.f32 0.0, %v542
  %544 = vmatmul.bf16.gmra.mxu0 %v368
  %v545 = vpop.f32.mrf.mxu0
  %v546 = vadd.f32 0.0, %v545
  %v547 = vpop.f32.mrf.mxu0
  %v548 = vadd.f32 0.0, %v547
  %549 = vmatmul.bf16.gmra.mxu0 %v369
  %v550 = vpop.f32.mrf.mxu0
  %v551 = vadd.f32 0.0, %v550
  %v552 = vpop.f32.mrf.mxu0
  %v553 = vadd.f32 0.0, %v552
  %554 = vmatmul.bf16.gmra.mxu0 %v370
  %v555 = vpop.f32.mrf.mxu0
  %v556 = vadd.f32 0.0, %v555
  %v557 = vpop.f32.mrf.mxu0
  %v558 = vadd.f32 0.0, %v557
  %559 = vmatmul.bf16.gmra.mxu0 %v371
  %v560 = vpop.f32.mrf.mxu0
  %v561 = vadd.f32 0.0, %v560
  %v562 = vpop.f32.mrf.mxu0
  %v563 = vadd.f32 0.0, %v562
  %564 = vmatmul.bf16.gmra.mxu0 %v372
  %v565 = vpop.f32.mrf.mxu0
  %v566 = vadd.f32 0.0, %v565
  %v567 = vpop.f32.mrf.mxu0
  %v568 = vadd.f32 0.0, %v567
  %569 = vmatmul.bf16.gmra.mxu0 %v373
  %v570 = vpop.f32.mrf.mxu0
  %v571 = vadd.f32 0.0, %v570
  %v572 = vpop.f32.mrf.mxu0
  %v573 = vadd.f32 0.0, %v572
  %574 = vmatmul.bf16.gmra.mxu0 %v374
  %v575 = vpop.f32.mrf.mxu0
  %v576 = vadd.f32 0.0, %v575
  %v577 = vpop.f32.mrf.mxu0
  %v578 = vadd.f32 0.0, %v577
  %579 = vmatmul.bf16.gmra.mxu0 %v375
  %v580 = vpop.f32.mrf.mxu0
  %v581 = vadd.f32 0.0, %v580
  %v582 = vpop.f32.mrf.mxu0
  %v583 = vadd.f32 0.0, %v582
  %584 = vmatmul.bf16.gmra.mxu0 %v376
  %v585 = vpop.f32.mrf.mxu0
  %v586 = vadd.f32 0.0, %v585
  %v587 = vpop.f32.mrf.mxu0
  %v588 = vadd.f32 0.0, %v587
  %589 = vmatmul.bf16.gmra.mxu0 %v377
  %v590 = vpop.f32.mrf.mxu0
  %v591 = vadd.f32 0.0, %v590
  %v592 = vpop.f32.mrf.mxu0
  %v593 = vadd.f32 0.0, %v592
  %594 = vmatmul.bf16.gmra.mxu0 %v378
  %v595 = vpop.f32.mrf.mxu0
  %v596 = vadd.f32 0.0, %v595
  %v597 = vpop.f32.mrf.mxu0
  %v598 = vadd.f32 0.0, %v597
  %599 = vmatmul.bf16.gmra.mxu0 %v379
  %v600 = vpop.f32.mrf.mxu0
  %v601 = vadd.f32 0.0, %v600
  %v602 = vpop.f32.mrf.mxu0
  %v603 = vadd.f32 0.0, %v602
  %604 = vmatmul.bf16.gmra.mxu0 %v380
  %v605 = vpop.f32.mrf.mxu0
  %v606 = vadd.f32 0.0, %v605
  %v607 = vpop.f32.mrf.mxu0
  %v608 = vadd.f32 0.0, %v607
  %609 = vmatmul.bf16.gmra.mxu0 %v381
  %v610 = vpop.f32.mrf.mxu0
  %v611 = vadd.f32 0.0, %v610
  %v612 = vpop.f32.mrf.mxu0
  %v613 = vadd.f32 0.0, %v612
  %614 = vmatmul.bf16.gmra.mxu0 %v382
  %v615 = vpop.f32.mrf.mxu0
  %v616 = vadd.f32 0.0, %v615
  %v617 = vpop.f32.mrf.mxu0
  %v618 = vadd.f32 0.0, %v617
  %619 = vmatmul.bf16.gmra.mxu0 %v383
  %v620 = vpop.f32.mrf.mxu0
  %v621 = vadd.f32 0.0, %v620
  %v622 = vpop.f32.mrf.mxu0
  %v623 = vadd.f32 0.0, %v622
  %624 = vmatmul.bf16.gmra.mxu0 %v384
  %v625 = vpop.f32.mrf.mxu0
  %v626 = vadd.f32 0.0, %v625
  %v627 = vpop.f32.mrf.mxu0
  %v628 = vadd.f32 0.0, %v627
  %629 = vmatmul.bf16.gmra.mxu0 %v385
  %v630 = vpop.f32.mrf.mxu0
  %v631 = vadd.f32 0.0, %v630
  %v632 = vpop.f32.mrf.mxu0
  %v633 = vadd.f32 0.0, %v632
  %634 = vdwg.mxu0
  %v635 = vadd.f32 %v82, %v476
  %v636 = vadd.f32 %v83, %v478
  %v637 = vadd.f32 %v84, %v481
  %v638 = vadd.f32 %v85, %v483
  %v639 = vadd.f32 %v86, %v486
  %v640 = vadd.f32 %v87, %v488
  %v641 = vadd.f32 %v88, %v491
  %v642 = vadd.f32 %v89, %v493
  %v643 = vadd.f32 %v90, %v496
  %v644 = vadd.f32 %v91, %v498
  %v645 = vadd.f32 %v92, %v501
  %v646 = vadd.f32 %v93, %v503
  %v647 = vadd.f32 %v94, %v506
  %v648 = vadd.f32 %v95, %v508
  %v649 = vadd.f32 %v96, %v511
  %v650 = vadd.f32 %v97, %v513
  %v651 = vadd.f32 %v98, %v516
  %v652 = vadd.f32 %v99, %v518
  %v653 = vadd.f32 %v100, %v521
  %v654 = vadd.f32 %v101, %v523
  %v655 = vadd.f32 %v102, %v526
  %v656 = vadd.f32 %v103, %v528
  %v657 = vadd.f32 %v104, %v531
  %v658 = vadd.f32 %v105, %v533
  %v659 = vadd.f32 %v106, %v536
  %v660 = vadd.f32 %v107, %v538
  %v661 = vadd.f32 %v108, %v541
  %v662 = vadd.f32 %v109, %v543
  %v663 = vadd.f32 %v110, %v546
  %v664 = vadd.f32 %v111, %v548
  %v665 = vadd.f32 %v112, %v551
  %v666 = vadd.f32 %v113, %v553
  %v667 = vadd.f32 %v114, %v556
  %v668 = vadd.f32 %v115, %v558
  %v669 = vadd.f32 %v116, %v561
  %v670 = vadd.f32 %v117, %v563
  %v671 = vadd.f32 %v118, %v566
  %v672 = vadd.f32 %v119, %v568
  %v673 = vadd.f32 %v120, %v571
  %v674 = vadd.f32 %v121, %v573
  %v675 = vadd.f32 %v122, %v576
  %v676 = vadd.f32 %v123, %v578
  %v677 = vadd.f32 %v124, %v581
  %v678 = vadd.f32 %v125, %v583
  %v679 = vadd.f32 %v126, %v586
  %v680 = vadd.f32 %v127, %v588
  %v681 = vadd.f32 %v128, %v591
  %v682 = vadd.f32 %v129, %v593
  %v683 = vadd.f32 %v130, %v596
  %v684 = vadd.f32 %v131, %v598
  %v685 = vadd.f32 %v132, %v601
  %v686 = vadd.f32 %v133, %v603
  %v687 = vadd.f32 %v134, %v606
  %v688 = vadd.f32 %v135, %v608
  %v689 = vadd.f32 %v136, %v611
  %v690 = vadd.f32 %v137, %v613
  %v691 = vadd.f32 %v138, %v616
  %v692 = vadd.f32 %v139, %v618
  %v693 = vadd.f32 %v140, %v621
  %v694 = vadd.f32 %v141, %v623
  %v695 = vadd.f32 %v142, %v626
  %v696 = vadd.f32 %v143, %v628
  %v697 = vadd.f32 %v144, %v631
  %v698 = vadd.f32 %v145, %v633
  %699 = vst [vmem:[#allocation2] sm:$0xff] %v635
  %700 = vst [vmem:[#allocation2 + $0x8] sm:$0xff] %v636
  %701 = vst [vmem:[#allocation2 + $0x10] sm:$0xff] %v637
  %702 = vst [vmem:[#allocation2 + $0x18] sm:$0xff] %v638
  %703 = vst [vmem:[#allocation2 + $0x20] sm:$0xff] %v639
  %704 = vst [vmem:[#allocation2 + $0x28] sm:$0xff] %v640
  %705 = vst [vmem:[#allocation2 + $0x30] sm:$0xff] %v641
  %706 = vst [vmem:[#allocation2 + $0x38] sm:$0xff] %v642
  %707 = vst [vmem:[#allocation2 + $0x40] sm:$0xff] %v643
  %708 = vst [vmem:[#allocation2 + $0x48] sm:$0xff] %v644
  %709 = vst [vmem:[#allocation2 + $0x50] sm:$0xff] %v645
  %710 = vst [vmem:[#allocation2 + $0x58] sm:$0xff] %v646
  %711 = vst [vmem:[#allocation2 + $0x60] sm:$0xff] %v647
  %712 = vst [vmem:[#allocation2 + $0x68] sm:$0xff] %v648
  %713 = vst [vmem:[#allocation2 + $0x70] sm:$0xff] %v649
  %714 = vst [vmem:[#allocation2 + $0x78] sm:$0xff] %v650
  %715 = vst [vmem:[#allocation2 + $0x80] sm:$0xff] %v651
  %716 = vst [vmem:[#allocation2 + $0x88] sm:$0xff] %v652
  %717 = vst [vmem:[#allocation2 + $0x90] sm:$0xff] %v653
  %718 = vst [vmem:[#allocation2 + $0x98] sm:$0xff] %v654
  %719 = vst [vmem:[#allocation2 + $0xa0] sm:$0xff] %v655
  %720 = vst [vmem:[#allocation2 + $0xa8] sm:$0xff] %v656
  %721 = vst [vmem:[#allocation2 + $0xb0] sm:$0xff] %v657
  %722 = vst [vmem:[#allocation2 + $0xb8] sm:$0xff] %v658
  %723 = vst [vmem:[#allocation2 + $0xc0] sm:$0xff] %v659
  %724 = vst [vmem:[#allocation2 + $0xc8] sm:$0xff] %v660
  %725 = vst [vmem:[#allocation2 + $0xd0] sm:$0xff] %v661
  %726 = vst [vmem:[#allocation2 + $0xd8] sm:$0xff] %v662
  %727 = vst [vmem:[#allocation2 + $0xe0] sm:$0xff] %v663
  %728 = vst [vmem:[#allocation2 + $0xe8] sm:$0xff] %v664
  %729 = vst [vmem:[#allocation2 + $0xf0] sm:$0xff] %v665
  %730 = vst [vmem:[#allocation2 + $0xf8] sm:$0xff] %v666
  %731 = vst [vmem:[#allocation2 + $0x100] sm:$0xff] %v667
  %732 = vst [vmem:[#allocation2 + $0x108] sm:$0xff] %v668
  %733 = vst [vmem:[#allocation2 + $0x110] sm:$0xff] %v669
  %734 = vst [vmem:[#allocation2 + $0x118] sm:$0xff] %v670
  %735 = vst [vmem:[#allocation2 + $0x120] sm:$0xff] %v671
  %736 = vst [vmem:[#allocation2 + $0x128] sm:$0xff] %v672
  %737 = vst [vmem:[#allocation2 + $0x130] sm:$0xff] %v673
  %738 = vst [vmem:[#allocation2 + $0x138] sm:$0xff] %v674
  %739 = vst [vmem:[#allocation2 + $0x140] sm:$0xff] %v675
  %740 = vst [vmem:[#allocation2 + $0x148] sm:$0xff] %v676
  %741 = vst [vmem:[#allocation2 + $0x150] sm:$0xff] %v677
  %742 = vst [vmem:[#allocation2 + $0x158] sm:$0xff] %v678
  %743 = vst [vmem:[#allocation2 + $0x160] sm:$0xff] %v679
  %744 = vst [vmem:[#allocation2 + $0x168] sm:$0xff] %v680
  %745 = vst [vmem:[#allocation2 + $0x170] sm:$0xff] %v681
  %746 = vst [vmem:[#allocation2 + $0x178] sm:$0xff] %v682
  %747 = vst [vmem:[#allocation2 + $0x180] sm:$0xff] %v683
  %748 = vst [vmem:[#allocation2 + $0x188] sm:$0xff] %v684
  %749 = vst [vmem:[#allocation2 + $0x190] sm:$0xff] %v685
  %750 = vst [vmem:[#allocation2 + $0x198] sm:$0xff] %v686
  %751 = vst [vmem:[#allocation2 + $0x1a0] sm:$0xff] %v687
  %752 = vst [vmem:[#allocation2 + $0x1a8] sm:$0xff] %v688
  %753 = vst [vmem:[#allocation2 + $0x1b0] sm:$0xff] %v689
  %754 = vst [vmem:[#allocation2 + $0x1b8] sm:$0xff] %v690
  %755 = vst [vmem:[#allocation2 + $0x1c0] sm:$0xff] %v691
  %756 = vst [vmem:[#allocation2 + $0x1c8] sm:$0xff] %v692
  %757 = vst [vmem:[#allocation2 + $0x1d0] sm:$0xff] %v693
  %758 = vst [vmem:[#allocation2 + $0x1d8] sm:$0xff] %v694
  %759 = vst [vmem:[#allocation2 + $0x1e0] sm:$0xff] %v695
  %760 = vst [vmem:[#allocation2 + $0x1e8] sm:$0xff] %v696
  %761 = vst [vmem:[#allocation2 + $0x1f0] sm:$0xff] %v697
  %762 = vst [vmem:[#allocation2 + $0x1f8] sm:$0xff] %v698
  // Predicated region
  $region18: #{convolution_forward.1} parent=0 // pred_check
    %p763 = pneg %p14
  $region19: #{convolution_forward.1} parent=0 // pred_check_branch
    %765 = sbr.rel (%p763) target = $region21
  $region20: #{convolution_forward.1} parent=0 // pred_region
    %v766 = vld [vmem:[%s2] sm:$0x1]
    %v767 = vld [vmem:[%s2 + $0x1] sm:$0x1]
    %v768 = vld [vmem:[%s2 + $0x2] sm:$0x1]
    %v769 = vld [vmem:[#allocation2] sm:$0xff]
    %v770 = vld [vmem:[#allocation2 + $0x8] sm:$0xff]
    %v771 = vld [vmem:[#allocation2 + $0x10] sm:$0xff]
    %v772 = vld [vmem:[#allocation2 + $0x18] sm:$0xff]
    %v773 = vld [vmem:[#allocation2 + $0x20] sm:$0xff]
    %v774 = vld [vmem:[#allocation2 + $0x28] sm:$0xff]
    %v775 = vld [vmem:[#allocation2 + $0x30] sm:$0xff]
    %v776 = vld [vmem:[#allocation2 + $0x38] sm:$0xff]
    %v777 = vld [vmem:[#allocation2 + $0x40] sm:$0xff]
    %v778 = vld [vmem:[#allocation2 + $0x48] sm:$0xff]
    %v779 = vld [vmem:[#allocation2 + $0x50] sm:$0xff]
    %v780 = vld [vmem:[#allocation2 + $0x58] sm:$0xff]
    %v781 = vld [vmem:[#allocation2 + $0x60] sm:$0xff]
    %v782 = vld [vmem:[#allocation2 + $0x68] sm:$0xff]
    %v783 = vld [vmem:[#allocation2 + $0x70] sm:$0xff]
    %v784 = vld [vmem:[#allocation2 + $0x78] sm:$0xff]
    %v785 = vld [vmem:[#allocation2 + $0x80] sm:$0xff]
    %v786 = vld [vmem:[#allocation2 + $0x88] sm:$0xff]
    %v787 = vld [vmem:[#allocation2 + $0x90] sm:$0xff]
    %v788 = vld [vmem:[#allocation2 + $0x98] sm:$0xff]
    %v789 = vld [vmem:[#allocation2 + $0xa0] sm:$0xff]
    %v790 = vld [vmem:[#allocation2 + $0xa8] sm:$0xff]
    %v791 = vld [vmem:[#allocation2 + $0xb0] sm:$0xff]
    %v792 = vld [vmem:[#allocation2 + $0xb8] sm:$0xff]
    %v793 = vld [vmem:[#allocation2 + $0xc0] sm:$0xff]
    %v794 = vld [vmem:[#allocation2 + $0xc8] sm:$0xff]
    %v795 = vld [vmem:[#allocation2 + $0xd0] sm:$0xff]
    %v796 = vld [vmem:[#allocation2 + $0xd8] sm:$0xff]
    %v797 = vld [vmem:[#allocation2 + $0xe0] sm:$0xff]
    %v798 = vld [vmem:[#allocation2 + $0xe8] sm:$0xff]
    %v799 = vld [vmem:[#allocation2 + $0xf0] sm:$0xff]
    %v800 = vld [vmem:[#allocation2 + $0xf8] sm:$0xff]
    %v801 = vld [vmem:[#allocation2 + $0x100] sm:$0xff]
    %v802 = vld [vmem:[#allocation2 + $0x108] sm:$0xff]
    %v803 = vld [vmem:[#allocation2 + $0x110] sm:$0xff]
    %v804 = vld [vmem:[#allocation2 + $0x118] sm:$0xff]
    %v805 = vld [vmem:[#allocation2 + $0x120] sm:$0xff]
    %v806 = vld [vmem:[#allocation2 + $0x128] sm:$0xff]
    %v807 = vld [vmem:[#allocation2 + $0x130] sm:$0xff]
    %v808 = vld [vmem:[#allocation2 + $0x138] sm:$0xff]
    %v809 = vld [vmem:[#allocation2 + $0x140] sm:$0xff]
    %v810 = vld [vmem:[#allocation2 + $0x148] sm:$0xff]
    %v811 = vld [vmem:[#allocation2 + $0x150] sm:$0xff]
    %v812 = vld [vmem:[#allocation2 + $0x158] sm:$0xff]
    %v813 = vld [vmem:[#allocation2 + $0x160] sm:$0xff]
    %v814 = vld [vmem:[#allocation2 + $0x168] sm:$0xff]
    %v815 = vld [vmem:[#allocation2 + $0x170] sm:$0xff]
    %v816 = vld [vmem:[#allocation2 + $0x178] sm:$0xff]
    %v817 = vld [vmem:[#allocation2 + $0x180] sm:$0xff]
    %v818 = vld [vmem:[#allocation2 + $0x188] sm:$0xff]
    %v819 = vld [vmem:[#allocation2 + $0x190] sm:$0xff]
    %v820 = vld [vmem:[#allocation2 + $0x198] sm:$0xff]
    %v821 = vld [vmem:[#allocation2 + $0x1a0] sm:$0xff]
    %v822 = vld [vmem:[#allocation2 + $0x1a8] sm:$0xff]
    %v823 = vld [vmem:[#allocation2 + $0x1b0] sm:$0xff]
    %v824 = vld [vmem:[#allocation2 + $0x1b8] sm:$0xff]
    %v825 = vld [vmem:[#allocation2 + $0x1c0] sm:$0xff]
    %v826 = vld [vmem:[#allocation2 + $0x1c8] sm:$0xff]
    %v827 = vld [vmem:[#allocation2 + $0x1d0] sm:$0xff]
    %v828 = vld [vmem:[#allocation2 + $0x1d8] sm:$0xff]
    %v829 = vld [vmem:[#allocation2 + $0x1e0] sm:$0xff]
    %v830 = vld [vmem:[#allocation2 + $0x1e8] sm:$0xff]
    %v831 = vld [vmem:[#allocation2 + $0x1f0] sm:$0xff]
    %v832 = vld [vmem:[#allocation2 + $0x1f8] sm:$0xff]
    %v833 = vperm.slane %v766, 0
    %v834 = vmul.f32 %v769, %v833
    %v835 = vmul.f32 %v770, %v833
    %v836 = vmul.f32 %v771, %v833
    %v837 = vmul.f32 %v772, %v833
    %v838 = vmul.f32 %v773, %v833
    %v839 = vmul.f32 %v774, %v833
    %v840 = vmul.f32 %v775, %v833
    %v841 = vmul.f32 %v776, %v833
    %v842 = vmul.f32 %v777, %v833
    %v843 = vmul.f32 %v778, %v833
    %v844 = vmul.f32 %v779, %v833
    %v845 = vmul.f32 %v780, %v833
    %v846 = vmul.f32 %v781, %v833
    %v847 = vmul.f32 %v782, %v833
    %v848 = vmul.f32 %v783, %v833
    %v849 = vmul.f32 %v784, %v833
    %v850 = vmul.f32 %v785, %v833
    %v851 = vmul.f32 %v786, %v833
    %v852 = vmul.f32 %v787, %v833
    %v853 = vmul.f32 %v788, %v833
    %v854 = vmul.f32 %v789, %v833
    %v855 = vmul.f32 %v790, %v833
    %v856 = vmul.f32 %v791, %v833
    %v857 = vmul.f32 %v792, %v833
    %v858 = vmul.f32 %v793, %v833
    %v859 = vmul.f32 %v794, %v833
    %v860 = vmul.f32 %v795, %v833
    %v861 = vmul.f32 %v796, %v833
    %v862 = vmul.f32 %v797, %v833
    %v863 = vmul.f32 %v798, %v833
    %v864 = vmul.f32 %v799, %v833
    %v865 = vmul.f32 %v800, %v833
    %v866 = vmul.f32 %v801, %v833
    %v867 = vmul.f32 %v802, %v833
    %v868 = vmul.f32 %v803, %v833
    %v869 = vmul.f32 %v804, %v833
    %v870 = vmul.f32 %v805, %v833
    %v871 = vmul.f32 %v806, %v833
    %v872 = vmul.f32 %v807, %v833
    %v873 = vmul.f32 %v808, %v833
    %v874 = vmul.f32 %v809, %v833
    %v875 = vmul.f32 %v810, %v833
    %v876 = vmul.f32 %v811, %v833
    %v877 = vmul.f32 %v812, %v833
    %v878 = vmul.f32 %v813, %v833
    %v879 = vmul.f32 %v814, %v833
    %v880 = vmul.f32 %v815, %v833
    %v881 = vmul.f32 %v816, %v833
    %v882 = vmul.f32 %v817, %v833
    %v883 = vmul.f32 %v818, %v833
    %v884 = vmul.f32 %v819, %v833
    %v885 = vmul.f32 %v820, %v833
    %v886 = vmul.f32 %v821, %v833
    %v887 = vmul.f32 %v822, %v833
    %v888 = vmul.f32 %v823, %v833
    %v889 = vmul.f32 %v824, %v833
    %v890 = vmul.f32 %v825, %v833
    %v891 = vmul.f32 %v826, %v833
    %v892 = vmul.f32 %v827, %v833
    %v893 = vmul.f32 %v828, %v833
    %v894 = vmul.f32 %v829, %v833
    %v895 = vmul.f32 %v830, %v833
    %v896 = vmul.f32 %v831, %v833
    %v897 = vmul.f32 %v832, %v833
    %v898 = vperm.slane %v767, 0
    %v899 = vadd.f32 %v834, %v898
    %v900 = vadd.f32 %v835, %v898
    %v901 = vadd.f32 %v836, %v898
    %v902 = vadd.f32 %v837, %v898
    %v903 = vadd.f32 %v838, %v898
    %v904 = vadd.f32 %v839, %v898
    %v905 = vadd.f32 %v840, %v898
    %v906 = vadd.f32 %v841, %v898
    %v907 = vadd.f32 %v842, %v898
    %v908 = vadd.f32 %v843, %v898
    %v909 = vadd.f32 %v844, %v898
    %v910 = vadd.f32 %v845, %v898
    %v911 = vadd.f32 %v846, %v898
    %v912 = vadd.f32 %v847, %v898
    %v913 = vadd.f32 %v848, %v898
    %v914 = vadd.f32 %v849, %v898
    %v915 = vadd.f32 %v850, %v898
    %v916 = vadd.f32 %v851, %v898
    %v917 = vadd.f32 %v852, %v898
    %v918 = vadd.f32 %v853, %v898
    %v919 = vadd.f32 %v854, %v898
    %v920 = vadd.f32 %v855, %v898
    %v921 = vadd.f32 %v856, %v898
    %v922 = vadd.f32 %v857, %v898
    %v923 = vadd.f32 %v858, %v898
    %v924 = vadd.f32 %v859, %v898
    %v925 = vadd.f32 %v860, %v898
    %v926 = vadd.f32 %v861, %v898
    %v927 = vadd.f32 %v862, %v898
    %v928 = vadd.f32 %v863, %v898
    %v929 = vadd.f32 %v864, %v898
    %v930 = vadd.f32 %v865, %v898
    %v931 = vadd.f32 %v866, %v898
    %v932 = vadd.f32 %v867, %v898
    %v933 = vadd.f32 %v868, %v898
    %v934 = vadd.f32 %v869, %v898
    %v935 = vadd.f32 %v870, %v898
    %v936 = vadd.f32 %v871, %v898
    %v937 = vadd.f32 %v872, %v898
    %v938 = vadd.f32 %v873, %v898
    %v939 = vadd.f32 %v874, %v898
    %v940 = vadd.f32 %v875, %v898
    %v941 = vadd.f32 %v876, %v898
    %v942 = vadd.f32 %v877, %v898
    %v943 = vadd.f32 %v878, %v898
    %v944 = vadd.f32 %v879, %v898
    %v945 = vadd.f32 %v880, %v898
    %v946 = vadd.f32 %v881, %v898
    %v947 = vadd.f32 %v882, %v898
    %v948 = vadd.f32 %v883, %v898
    %v949 = vadd.f32 %v884, %v898
    %v950 = vadd.f32 %v885, %v898
    %v951 = vadd.f32 %v886, %v898
    %v952 = vadd.f32 %v887, %v898
    %v953 = vadd.f32 %v888, %v898
    %v954 = vadd.f32 %v889, %v898
    %v955 = vadd.f32 %v890, %v898
    %v956 = vadd.f32 %v891, %v898
    %v957 = vadd.f32 %v892, %v898
    %v958 = vadd.f32 %v893, %v898
    %v959 = vadd.f32 %v894, %v898
    %v960 = vadd.f32 %v895, %v898
    %v961 = vadd.f32 %v896, %v898
    %v962 = vadd.f32 %v897, %v898
    %vm963 = vcmp.gt.f32.partialorder %v899, 0.0
    %vm964 = vcmp.gt.f32.partialorder %v900, 0.0
    %vm965 = vcmp.gt.f32.partialorder %v901, 0.0
    %vm966 = vcmp.gt.f32.partialorder %v902, 0.0
    %vm967 = vcmp.gt.f32.partialorder %v903, 0.0
    %vm968 = vcmp.gt.f32.partialorder %v904, 0.0
    %vm969 = vcmp.gt.f32.partialorder %v905, 0.0
    %vm970 = vcmp.gt.f32.partialorder %v906, 0.0
    %vm971 = vcmp.gt.f32.partialorder %v907, 0.0
    %vm972 = vcmp.gt.f32.partialorder %v908, 0.0
    %vm973 = vcmp.gt.f32.partialorder %v909, 0.0
    %vm974 = vcmp.gt.f32.partialorder %v910, 0.0
    %vm975 = vcmp.gt.f32.partialorder %v911, 0.0
    %vm976 = vcmp.gt.f32.partialorder %v912, 0.0
    %vm977 = vcmp.gt.f32.partialorder %v913, 0.0
    %vm978 = vcmp.gt.f32.partialorder %v914, 0.0
    %vm979 = vcmp.gt.f32.partialorder %v915, 0.0
    %vm980 = vcmp.gt.f32.partialorder %v916, 0.0
    %vm981 = vcmp.gt.f32.partialorder %v917, 0.0
    %vm982 = vcmp.gt.f32.partialorder %v918, 0.0
    %vm983 = vcmp.gt.f32.partialorder %v919, 0.0
    %vm984 = vcmp.gt.f32.partialorder %v920, 0.0
    %vm985 = vcmp.gt.f32.partialorder %v921, 0.0
    %vm986 = vcmp.gt.f32.partialorder %v922, 0.0
    %vm987 = vcmp.gt.f32.partialorder %v923, 0.0
    %vm988 = vcmp.gt.f32.partialorder %v924, 0.0
    %vm989 = vcmp.gt.f32.partialorder %v925, 0.0
    %vm990 = vcmp.gt.f32.partialorder %v926, 0.0
    %vm991 = vcmp.gt.f32.partialorder %v927, 0.0
    %vm992 = vcmp.gt.f32.partialorder %v928, 0.0
    %vm993 = vcmp.gt.f32.partialorder %v929, 0.0
    %vm994 = vcmp.gt.f32.partialorder %v930, 0.0
    %vm995 = vcmp.gt.f32.partialorder %v931, 0.0
    %vm996 = vcmp.gt.f32.partialorder %v932, 0.0
    %vm997 = vcmp.gt.f32.partialorder %v933, 0.0
    %vm998 = vcmp.gt.f32.partialorder %v934, 0.0
    %vm999 = vcmp.gt.f32.partialorder %v935, 0.0
    %vm1000 = vcmp.gt.f32.partialorder %v936, 0.0
    %vm1001 = vcmp.gt.f32.partialorder %v937, 0.0
    %vm1002 = vcmp.gt.f32.partialorder %v938, 0.0
    %vm1003 = vcmp.gt.f32.partialorder %v939, 0.0
    %vm1004 = vcmp.gt.f32.partialorder %v940, 0.0
    %vm1005 = vcmp.gt.f32.partialorder %v941, 0.0
    %vm1006 = vcmp.gt.f32.partialorder %v942, 0.0
    %vm1007 = vcmp.gt.f32.partialorder %v943, 0.0
    %vm1008 = vcmp.gt.f32.partialorder %v944, 0.0
    %vm1009 = vcmp.gt.f32.partialorder %v945, 0.0
    %vm1010 = vcmp.gt.f32.partialorder %v946, 0.0
    %vm1011 = vcmp.gt.f32.partialorder %v947, 0.0
    %vm1012 = vcmp.gt.f32.partialorder %v948, 0.0
    %vm1013 = vcmp.gt.f32.partialorder %v949, 0.0
    %vm1014 = vcmp.gt.f32.partialorder %v950, 0.0
    %vm1015 = vcmp.gt.f32.partialorder %v951, 0.0
    %vm1016 = vcmp.gt.f32.partialorder %v952, 0.0
    %vm1017 = vcmp.gt.f32.partialorder %v953, 0.0
    %vm1018 = vcmp.gt.f32.partialorder %v954, 0.0
    %vm1019 = vcmp.gt.f32.partialorder %v955, 0.0
    %vm1020 = vcmp.gt.f32.partialorder %v956, 0.0
    %vm1021 = vcmp.gt.f32.partialorder %v957, 0.0
    %vm1022 = vcmp.gt.f32.partialorder %v958, 0.0
    %vm1023 = vcmp.gt.f32.partialorder %v959, 0.0
    %vm1024 = vcmp.gt.f32.partialorder %v960, 0.0
    %vm1025 = vcmp.gt.f32.partialorder %v961, 0.0
    %vm1026 = vcmp.gt.f32.partialorder %v962, 0.0
    %v1027 = vperm.slane %v768, 0
    %v1028 = vmul.f32 %v1027, %v899
    %v1029 = vmul.f32 %v1027, %v900
    %v1030 = vmul.f32 %v1027, %v901
    %v1031 = vmul.f32 %v1027, %v902
    %v1032 = vmul.f32 %v1027, %v903
    %v1033 = vmul.f32 %v1027, %v904
    %v1034 = vmul.f32 %v1027, %v905
    %v1035 = vmul.f32 %v1027, %v906
    %v1036 = vmul.f32 %v1027, %v907
    %v1037 = vmul.f32 %v1027, %v908
    %v1038 = vmul.f32 %v1027, %v909
    %v1039 = vmul.f32 %v1027, %v910
    %v1040 = vmul.f32 %v1027, %v911
    %v1041 = vmul.f32 %v1027, %v912
    %v1042 = vmul.f32 %v1027, %v913
    %v1043 = vmul.f32 %v1027, %v914
    %v1044 = vmul.f32 %v1027, %v915
    %v1045 = vmul.f32 %v1027, %v916
    %v1046 = vmul.f32 %v1027, %v917
    %v1047 = vmul.f32 %v1027, %v918
    %v1048 = vmul.f32 %v1027, %v919
    %v1049 = vmul.f32 %v1027, %v920
    %v1050 = vmul.f32 %v1027, %v921
    %v1051 = vmul.f32 %v1027, %v922
    %v1052 = vmul.f32 %v1027, %v923
    %v1053 = vmul.f32 %v1027, %v924
    %v1054 = vmul.f32 %v1027, %v925
    %v1055 = vmul.f32 %v1027, %v926
    %v1056 = vmul.f32 %v1027, %v927
    %v1057 = vmul.f32 %v1027, %v928
    %v1058 = vmul.f32 %v1027, %v929
    %v1059 = vmul.f32 %v1027, %v930
    %v1060 = vmul.f32 %v1027, %v931
    %v1061 = vmul.f32 %v1027, %v932
    %v1062 = vmul.f32 %v1027, %v933
    %v1063 = vmul.f32 %v1027, %v934
    %v1064 = vmul.f32 %v1027, %v935
    %v1065 = vmul.f32 %v1027, %v936
    %v1066 = vmul.f32 %v1027, %v937
    %v1067 = vmul.f32 %v1027, %v938
    %v1068 = vmul.f32 %v1027, %v939
    %v1069 = vmul.f32 %v1027, %v940
    %v1070 = vmul.f32 %v1027, %v941
    %v1071 = vmul.f32 %v1027, %v942
    %v1072 = vmul.f32 %v1027, %v943
    %v1073 = vmul.f32 %v1027, %v944
    %v1074 = vmul.f32 %v1027, %v945
    %v1075 = vmul.f32 %v1027, %v946
    %v1076 = vmul.f32 %v1027, %v947
    %v1077 = vmul.f32 %v1027, %v948
    %v1078 = vmul.f32 %v1027, %v949
    %v1079 = vmul.f32 %v1027, %v950
    %v1080 = vmul.f32 %v1027, %v951
    %v1081 = vmul.f32 %v1027, %v952
    %v1082 = vmul.f32 %v1027, %v953
    %v1083 = vmul.f32 %v1027, %v954
    %v1084 = vmul.f32 %v1027, %v955
    %v1085 = vmul.f32 %v1027, %v956
    %v1086 = vmul.f32 %v1027, %v957
    %v1087 = vmul.f32 %v1027, %v958
    %v1088 = vmul.f32 %v1027, %v959
    %v1089 = vmul.f32 %v1027, %v960
    %v1090 = vmul.f32 %v1027, %v961
    %v1091 = vmul.f32 %v1027, %v962
    %v1092 = vsel %vm963, %v899, %v1028
    %v1093 = vsel %vm964, %v900, %v1029
    %v1094 = vsel %vm965, %v901, %v1030
    %v1095 = vsel %vm966, %v902, %v1031
    %v1096 = vsel %vm967, %v903, %v1032
    %v1097 = vsel %vm968, %v904, %v1033
    %v1098 = vsel %vm969, %v905, %v1034
    %v1099 = vsel %vm970, %v906, %v1035
    %v1100 = vsel %vm971, %v907, %v1036
    %v1101 = vsel %vm972, %v908, %v1037
    %v1102 = vsel %vm973, %v909, %v1038
    %v1103 = vsel %vm974, %v910, %v1039
    %v1104 = vsel %vm975, %v911, %v1040
    %v1105 = vsel %vm976, %v912, %v1041
    %v1106 = vsel %vm977, %v913, %v1042
    %v1107 = vsel %vm978, %v914, %v1043
    %v1108 = vsel %vm979, %v915, %v1044
    %v1109 = vsel %vm980, %v916, %v1045
    %v1110 = vsel %vm981, %v917, %v1046
    %v1111 = vsel %vm982, %v918, %v1047
    %v1112 = vsel %vm983, %v919, %v1048
    %v1113 = vsel %vm984, %v920, %v1049
    %v1114 = vsel %vm985, %v921, %v1050
    %v1115 = vsel %vm986, %v922, %v1051
    %v1116 = vsel %vm987, %v923, %v1052
    %v1117 = vsel %vm988, %v924, %v1053
    %v1118 = vsel %vm989, %v925, %v1054
    %v1119 = vsel %vm990, %v926, %v1055
    %v1120 = vsel %vm991, %v927, %v1056
    %v1121 = vsel %vm992, %v928, %v1057
    %v1122 = vsel %vm993, %v929, %v1058
    %v1123 = vsel %vm994, %v930, %v1059
    %v1124 = vsel %vm995, %v931, %v1060
    %v1125 = vsel %vm996, %v932, %v1061
    %v1126 = vsel %vm997, %v933, %v1062
    %v1127 = vsel %vm998, %v934, %v1063
    %v1128 = vsel %vm999, %v935, %v1064
    %v1129 = vsel %vm1000, %v936, %v1065
    %v1130 = vsel %vm1001, %v937, %v1066
    %v1131 = vsel %vm1002, %v938, %v1067
    %v1132 = vsel %vm1003, %v939, %v1068
    %v1133 = vsel %vm1004, %v940, %v1069
    %v1134 = vsel %vm1005, %v941, %v1070
    %v1135 = vsel %vm1006, %v942, %v1071
    %v1136 = vsel %vm1007, %v943, %v1072
    %v1137 = vsel %vm1008, %v944, %v1073
    %v1138 = vsel %vm1009, %v945, %v1074
    %v1139 = vsel %vm1010, %v946, %v1075
    %v1140 = vsel %vm1011, %v947, %v1076
    %v1141 = vsel %vm1012, %v948, %v1077
    %v1142 = vsel %vm1013, %v949, %v1078
    %v1143 = vsel %vm1014, %v950, %v1079
    %v1144 = vsel %vm1015, %v951, %v1080
    %v1145 = vsel %vm1016, %v952, %v1081
    %v1146 = vsel %vm1017, %v953, %v1082
    %v1147 = vsel %vm1018, %v954, %v1083
    %v1148 = vsel %vm1019, %v955, %v1084
    %v1149 = vsel %vm1020, %v956, %v1085
    %v1150 = vsel %vm1021, %v957, %v1086
    %v1151 = vsel %vm1022, %v958, %v1087
    %v1152 = vsel %vm1023, %v959, %v1088
    %v1153 = vsel %vm1024, %v960, %v1089
    %v1154 = vsel %vm1025, %v961, %v1090
    %v1155 = vsel %vm1026, %v962, %v1091
    %1156 = vst [vmem:[%s3] sm:$0xff] %v1092
    %1157 = vst [vmem:[%s3 + $0x8] sm:$0xff] %v1093
    %1158 = vst [vmem:[%s3 + $0x10] sm:$0xff] %v1094
    %1159 = vst [vmem:[%s3 + $0x18] sm:$0xff] %v1095
    %1160 = vst [vmem:[%s3 + $0x20] sm:$0xff] %v1096
    %1161 = vst [vmem:[%s3 + $0x28] sm:$0xff] %v1097
    %1162 = vst [vmem:[%s3 + $0x30] sm:$0xff] %v1098
    %1163 = vst [vmem:[%s3 + $0x38] sm:$0xff] %v1099
    %1164 = vst [vmem:[%s3 + $0x40] sm:$0xff] %v1100
    %1165 = vst [vmem:[%s3 + $0x48] sm:$0xff] %v1101
    %1166 = vst [vmem:[%s3 + $0x50] sm:$0xff] %v1102
    %1167 = vst [vmem:[%s3 + $0x58] sm:$0xff] %v1103
    %1168 = vst [vmem:[%s3 + $0x60] sm:$0xff] %v1104
    %1169 = vst [vmem:[%s3 + $0x68] sm:$0xff] %v1105
    %1170 = vst [vmem:[%s3 + $0x70] sm:$0xff] %v1106
    %1171 = vst [vmem:[%s3 + $0x78] sm:$0xff] %v1107
    %1172 = vst [vmem:[%s3 + $0x80] sm:$0xff] %v1108
    %1173 = vst [vmem:[%s3 + $0x88] sm:$0xff] %v1109
    %1174 = vst [vmem:[%s3 + $0x90] sm:$0xff] %v1110
    %1175 = vst [vmem:[%s3 + $0x98] sm:$0xff] %v1111
    %1176 = vst [vmem:[%s3 + $0xa0] sm:$0xff] %v1112
    %1177 = vst [vmem:[%s3 + $0xa8] sm:$0xff] %v1113
    %1178 = vst [vmem:[%s3 + $0xb0] sm:$0xff] %v1114
    %1179 = vst [vmem:[%s3 + $0xb8] sm:$0xff] %v1115
    %1180 = vst [vmem:[%s3 + $0xc0] sm:$0xff] %v1116
    %1181 = vst [vmem:[%s3 + $0xc8] sm:$0xff] %v1117
    %1182 = vst [vmem:[%s3 + $0xd0] sm:$0xff] %v1118
    %1183 = vst [vmem:[%s3 + $0xd8] sm:$0xff] %v1119
    %1184 = vst [vmem:[%s3 + $0xe0] sm:$0xff] %v1120
    %1185 = vst [vmem:[%s3 + $0xe8] sm:$0xff] %v1121
    %1186 = vst [vmem:[%s3 + $0xf0] sm:$0xff] %v1122
    %1187 = vst [vmem:[%s3 + $0xf8] sm:$0xff] %v1123
    %1188 = vst [vmem:[%s3 + $0x100] sm:$0xff] %v1124
    %1189 = vst [vmem:[%s3 + $0x108] sm:$0xff] %v1125
    %1190 = vst [vmem:[%s3 + $0x110] sm:$0xff] %v1126
    %1191 = vst [vmem:[%s3 + $0x118] sm:$0xff] %v1127
    %1192 = vst [vmem:[%s3 + $0x120] sm:$0xff] %v1128
    %1193 = vst [vmem:[%s3 + $0x128] sm:$0xff] %v1129
    %1194 = vst [vmem:[%s3 + $0x130] sm:$0xff] %v1130
    %1195 = vst [vmem:[%s3 + $0x138] sm:$0xff] %v1131
    %1196 = vst [vmem:[%s3 + $0x140] sm:$0xff] %v1132
    %1197 = vst [vmem:[%s3 + $0x148] sm:$0xff] %v1133
    %1198 = vst [vmem:[%s3 + $0x150] sm:$0xff] %v1134
    %1199 = vst [vmem:[%s3 + $0x158] sm:$0xff] %v1135
    %1200 = vst [vmem:[%s3 + $0x160] sm:$0xff] %v1136
    %1201 = vst [vmem:[%s3 + $0x168] sm:$0xff] %v1137
    %1202 = vst [vmem:[%s3 + $0x170] sm:$0xff] %v1138
    %1203 = vst [vmem:[%s3 + $0x178] sm:$0xff] %v1139
    %1204 = vst [vmem:[%s3 + $0x180] sm:$0xff] %v1140
    %1205 = vst [vmem:[%s3 + $0x188] sm:$0xff] %v1141
    %1206 = vst [vmem:[%s3 + $0x190] sm:$0xff] %v1142
    %1207 = vst [vmem:[%s3 + $0x198] sm:$0xff] %v1143
    %1208 = vst [vmem:[%s3 + $0x1a0] sm:$0xff] %v1144
    %1209 = vst [vmem:[%s3 + $0x1a8] sm:$0xff] %v1145
    %1210 = vst [vmem:[%s3 + $0x1b0] sm:$0xff] %v1146
    %1211 = vst [vmem:[%s3 + $0x1b8] sm:$0xff] %v1147
    %1212 = vst [vmem:[%s3 + $0x1c0] sm:$0xff] %v1148
    %1213 = vst [vmem:[%s3 + $0x1c8] sm:$0xff] %v1149
    %1214 = vst [vmem:[%s3 + $0x1d0] sm:$0xff] %v1150
    %1215 = vst [vmem:[%s3 + $0x1d8] sm:$0xff] %v1151
    %1216 = vst [vmem:[%s3 + $0x1e0] sm:$0xff] %v1152
    %1217 = vst [vmem:[%s3 + $0x1e8] sm:$0xff] %v1153
    %1218 = vst [vmem:[%s3 + $0x1f0] sm:$0xff] %v1154
    %1219 = vst [vmem:[%s3 + $0x1f8] sm:$0xff] %v1155
  $region21: #{convolution_forward.1} parent=0 // pred_fallthru
    _
  // Predicated region
  $region22: #{convolution_forward.1} parent=0 // pred_check
    _
  $region23: #{convolution_forward.1} parent=0 // pred_check_branch
    %1221 = sbr.rel (0) target = $region25
  $region24: #{convolution_forward.1} parent=0 // pred_region
    _
  $region25: #{convolution_forward.1} parent=0 // pred_fallthru
    _
  // Predicated region
  $region26: #{convolution_forward.1} parent=0 // pred_check
    _
  $region27: #{convolution_forward.1} parent=0 // pred_check_branch
    %1223 = sbr.rel (0) target = $region29
  $region28: #{convolution_forward.1} parent=0 // pred_region
    _
  $region29: #{convolution_forward.1} parent=0 // pred_fallthru
    _

</llo_original>
